<compile_context>
chip_gen: v7x
topology: tpu7x:2x2x1
jax: 0.10.0
libtpu: 0.0.40
codegen_flags: <defaults>
</compile_context>

<pallas_src>
import jax
import jax.numpy as jnp
import numpy as np
from jax.experimental import pallas as pl
from jax.experimental.pallas import tpu as pltpu


LANE = 128     # lane width: output feature dim padded to a multiple of this
SUBLANE = 8    # sublane width: batch dim padded to a multiple of this

HIDDEN1 = 512
HIDDEN2 = 256


def _mlp_kernel(x_ref,
                w1_ref, b1_ref,
                w2_ref, b2_ref,
                w3_ref, b3_ref,
                out_ref):
    """Fused fc1 -> ReLU -> fc2 -> ReLU -> fc3 (everything resident in VMEM)."""
    # ---- fc1 + ReLU ----  (bf16 operands on the MXU, f32 accumulation)
    h = jnp.dot(x_ref[...], w1_ref[...],
                preferred_element_type=jnp.float32) + b1_ref[...]
    h = jnp.maximum(h, 0.0)

    # ---- fc2 + ReLU ----
    h = jnp.dot(h.astype(jnp.bfloat16), w2_ref[...],
                preferred_element_type=jnp.float32) + b2_ref[...]
    h = jnp.maximum(h, 0.0)

    # ---- fc3 (output features padded to a lane-dense multiple of 128) ----
    h = jnp.dot(h.astype(jnp.bfloat16), w3_ref[...],
                preferred_element_type=jnp.float32) + b3_ref[...]
    out_ref[...] = h.astype(out_ref.dtype)


def _round_up(n, m):
    return ((n + m - 1) // m) * m


@jax.jit
def simple_model_forward(x, params):
    """x: (B, input_size) float32 -> (B, output_size) float32."""
    B, in_size = x.shape
    out_size = params["w3"].shape[1]

    B_pad = _round_up(B, SUBLANE)
    out_padded = _round_up(out_size, LANE)

    # bf16 MXU operands; biases stay f32 (added post-accumulation on the VPU).
    w1 = params["w1"].astype(jnp.bfloat16)
    w2 = params["w2"].astype(jnp.bfloat16)
    w3 = params["w3"].astype(jnp.bfloat16)
    b1 = params["b1"].astype(jnp.float32)
    b2 = params["b2"].astype(jnp.float32)
    b3 = params["b3"].astype(jnp.float32)

    # Zero-pad fc3 output features -> lane-dense (128-mult) final store.
    if out_padded != out_size:
        w3 = jnp.pad(w3, ((0, 0), (0, out_padded - out_size)))
        b3 = jnp.pad(b3, ((0, 0), (0, out_padded - out_size)))

    # Zero-pad batch -> sublane-aligned (8-mult) loads/stores.
    x_in = x.astype(jnp.bfloat16)
    if B_pad != B:
        x_in = jnp.pad(x_in, ((0, B_pad - B), (0, 0)))

    tensor_args = (x_in, w1, b1, w2, b2, w3, b3)

    # Single grid step; each operand's block equals its full array shape, so
    # the (8,128) tiling rule is trivially satisfied.
    in_specs = [
        pl.BlockSpec(a.shape, lambda i, nd=a.ndim: (0,) * nd)
        for a in tensor_args
    ]

    flops = 2 * B_pad * (in_size * HIDDEN1 + HIDDEN1 * HIDDEN2
                         + HIDDEN2 * out_padded)
    bytes_accessed = (sum(a.size * a.dtype.itemsize for a in tensor_args)
                      + B_pad * out_padded * 4)

    out_padded_arr = pl.pallas_call(
        _mlp_kernel,
        out_shape=jax.ShapeDtypeStruct((B_pad, out_padded), jnp.float32),
        grid=(1,),
        in_specs=in_specs,
        out_specs=pl.BlockSpec((B_pad, out_padded), lambda i: (0, 0)),
        compiler_params=pltpu.CompilerParams(
            dimension_semantics=("arbitrary",)),
        cost_estimate=pl.CostEstimate(flops=flops, transcendentals=0,
                                      bytes_accessed=bytes_accessed),
    )(*tensor_args)

    return out_padded_arr[:B, :out_size]


def init_params(key, input_size, output_size):
    """PyTorch-default init for Linear (U(-1/sqrt(fan_in), +1/sqrt(fan_in))).
    Weights stored pre-transposed as (in_features, out_features)."""
    def linear(key, fan_in, fan_out):
        kw, kb = jax.random.split(key)
        bound = 1.0 / np.sqrt(fan_in)
        w = jax.random.uniform(kw, (fan_in, fan_out), jnp.float32, -bound, bound)
        b = jax.random.uniform(kb, (1, fan_out), jnp.float32, -bound, bound)
        return w, b

    k1, k2, k3 = jax.random.split(key, 3)
    w1, b1 = linear(k1, input_size, HIDDEN1)
    w2, b2 = linear(k2, HIDDEN1, HIDDEN2)
    w3, b3 = linear(k3, HIDDEN2, output_size)
    return {"w1": w1, "b1": b1, "w2": w2, "b2": b2, "w3": w3, "b3": b3}


def _reference(x, p):
    """Pure-JAX reference with the same bf16-MXU / f32-accumulate recipe."""
    def dot_bf16(a, w):
        return jnp.dot(a.astype(jnp.bfloat16), w.astype(jnp.bfloat16),
                       preferred_element_type=jnp.float32)
    h = jnp.maximum(dot_bf16(x, p["w1"]) + p["b1"], 0.0)
    h = jnp.maximum(dot_bf16(h, p["w2"]) + p["b2"], 0.0)
    return dot_bf16(h, p["w3"]) + p["b3"]


if __name__ == "__main__":
    input_size, output_size, batch = 32, 16, 8

    key = jax.random.PRNGKey(0)
    kx, kp = jax.random.split(key)
    x = jax.random.normal(kx, (batch, input_size), jnp.float32)
    params = init_params(kp, input_size, output_size)

    out = simple_model_forward(x, params)
    out = jax.block_until_ready(out)

    ref = _reference(x, params)
    np.testing.assert_allclose(np.asarray(out), np.asarray(ref),
                               rtol=1e-2, atol=1e-2)
    assert out.shape == (batch, output_size)
    assert bool(jnp.all(jnp.isfinite(out)))

    print("KERNEL_OK")
</pallas_src>

<mosaic_0001>
module attributes {stable_mosaic.version = 11 : i64} {
  func.func @_mlp_kernel(%arg0: i32, %arg1: memref<8x32xbf16, #tpu.memory_space<vmem>>, %arg2: memref<32x512xbf16, #tpu.memory_space<vmem>>, %arg3: memref<1x512xf32, #tpu.memory_space<vmem>>, %arg4: memref<512x256xbf16, #tpu.memory_space<vmem>>, %arg5: memref<1x256xf32, #tpu.memory_space<vmem>>, %arg6: memref<256x128xbf16, #tpu.memory_space<vmem>>, %arg7: memref<1x128xf32, #tpu.memory_space<vmem>>, %arg8: memref<8x128xf32, #tpu.memory_space<vmem>>) attributes {dimension_semantics = [#tpu.dimension_semantics<arbitrary>], iteration_bounds = array<i64: 1>, scalar_prefetch = 0 : i64, scratch_operands = 0 : i64, tpu.core_type = #tpu.core_type<tc>, window_params = [{pipeline_mode = #tpu.pipeline_mode<synchronous>, transform_indices = @transform_0, window_bounds = array<i64: 8, 32>}, {pipeline_mode = #tpu.pipeline_mode<synchronous>, transform_indices = @transform_1, window_bounds = array<i64: 32, 512>}, {pipeline_mode = #tpu.pipeline_mode<synchronous>, transform_indices = @transform_2, window_bounds = array<i64: 1, 512>}, {pipeline_mode = #tpu.pipeline_mode<synchronous>, transform_indices = @transform_3, window_bounds = array<i64: 512, 256>}, {pipeline_mode = #tpu.pipeline_mode<synchronous>, transform_indices = @transform_4, window_bounds = array<i64: 1, 256>}, {pipeline_mode = #tpu.pipeline_mode<synchronous>, transform_indices = @transform_5, window_bounds = array<i64: 256, 128>}, {pipeline_mode = #tpu.pipeline_mode<synchronous>, transform_indices = @transform_6, window_bounds = array<i64: 1, 128>}, {pipeline_mode = #tpu.pipeline_mode<synchronous>, transform_indices = @transform_7, window_bounds = array<i64: 8, 128>}]} {
    %c0 = arith.constant 0 : index
    %c0_0 = arith.constant 0 : index
    %0 = vector.load %arg1[%c0, %c0_0] : memref<8x32xbf16, #tpu.memory_space<vmem>>, vector<8x32xbf16>
    %c0_1 = arith.constant 0 : index
    %c0_2 = arith.constant 0 : index
    %1 = vector.load %arg2[%c0_1, %c0_2] : memref<32x512xbf16, #tpu.memory_space<vmem>>, vector<32x512xbf16>
    %cst = arith.constant dense<0.000000e+00> : vector<8x512xf32>
    %2 = tpu.matmul %0, %1, %cst {dimension_numbers = #tpu.dot_dimension_numbers<[1], [0], [0], [1], [0, 0, 1, 1], [], []>} : vector<8x32xbf16>, vector<32x512xbf16>, vector<8x512xf32> -> vector<8x512xf32>
    %c0_3 = arith.constant 0 : index
    %c0_4 = arith.constant 0 : index
    %3 = vector.load %arg3[%c0_3, %c0_4] : memref<1x512xf32, #tpu.memory_space<vmem>>, vector<1x512xf32>
    %4 = vector.broadcast %3 : vector<1x512xf32> to vector<8x512xf32>
    %5 = arith.addf %2, %4 : vector<8x512xf32>
    %cst_5 = arith.constant 0.000000e+00 : f32
    %6 = vector.broadcast %cst_5 : f32 to vector<8x512xf32>
    %7 = arith.maximumf %5, %6 : vector<8x512xf32>
    %8 = arith.truncf %7 : vector<8x512xf32> to vector<8x512xbf16>
    %c0_6 = arith.constant 0 : index
    %c0_7 = arith.constant 0 : index
    %9 = vector.load %arg4[%c0_6, %c0_7] : memref<512x256xbf16, #tpu.memory_space<vmem>>, vector<512x256xbf16>
    %cst_8 = arith.constant dense<0.000000e+00> : vector<8x256xf32>
    %10 = tpu.matmul %8, %9, %cst_8 {dimension_numbers = #tpu.dot_dimension_numbers<[1], [0], [0], [1], [0, 0, 1, 1], [], []>} : vector<8x512xbf16>, vector<512x256xbf16>, vector<8x256xf32> -> vector<8x256xf32>
    %c0_9 = arith.constant 0 : index
    %c0_10 = arith.constant 0 : index
    %11 = vector.load %arg5[%c0_9, %c0_10] : memref<1x256xf32, #tpu.memory_space<vmem>>, vector<1x256xf32>
    %12 = vector.broadcast %11 : vector<1x256xf32> to vector<8x256xf32>
    %13 = arith.addf %10, %12 : vector<8x256xf32>
    %cst_11 = arith.constant 0.000000e+00 : f32
    %14 = vector.broadcast %cst_11 : f32 to vector<8x256xf32>
    %15 = arith.maximumf %13, %14 : vector<8x256xf32>
    %16 = arith.truncf %15 : vector<8x256xf32> to vector<8x256xbf16>
    %c0_12 = arith.constant 0 : index
    %c0_13 = arith.constant 0 : index
    %17 = vector.load %arg6[%c0_12, %c0_13] : memref<256x128xbf16, #tpu.memory_space<vmem>>, vector<256x128xbf16>
    %cst_14 = arith.constant dense<0.000000e+00> : vector<8x128xf32>
    %18 = tpu.matmul %16, %17, %cst_14 {dimension_numbers = #tpu.dot_dimension_numbers<[1], [0], [0], [1], [0, 0, 1, 1], [], []>} : vector<8x256xbf16>, vector<256x128xbf16>, vector<8x128xf32> -> vector<8x128xf32>
    %c0_15 = arith.constant 0 : index
    %c0_16 = arith.constant 0 : index
    %19 = vector.load %arg7[%c0_15, %c0_16] : memref<1x128xf32, #tpu.memory_space<vmem>>, vector<1x128xf32>
    %20 = vector.broadcast %19 : vector<1x128xf32> to vector<8x128xf32>
    %21 = arith.addf %18, %20 : vector<8x128xf32>
    %c0_17 = arith.constant 0 : index
    %c0_18 = arith.constant 0 : index
    %22 = vector.load %arg8[%c0_17, %c0_18] : memref<8x128xf32, #tpu.memory_space<vmem>>, vector<8x128xf32>
    tpu.vector_store %arg8[%c0_17, %c0_18], %21 {strides = array<i32>} : memref<8x128xf32, #tpu.memory_space<vmem>>, vector<8x128xf32>,
    return
  }
  func.func @transform_0(%arg0: i32) -> (i32, i32) {
    %c0_i32 = arith.constant 0 : i32
    %c0_i32_0 = arith.constant 0 : i32
    %c0_i32_1 = arith.constant 0 : i32
    return %c0_i32, %c0_i32_0 : i32, i32
  }
  func.func @transform_1(%arg0: i32) -> (i32, i32) {
    %c0_i32 = arith.constant 0 : i32
    %c0_i32_0 = arith.constant 0 : i32
    %c0_i32_1 = arith.constant 0 : i32
    return %c0_i32, %c0_i32_0 : i32, i32
  }
  func.func @transform_2(%arg0: i32) -> (i32, i32) {
    %c0_i32 = arith.constant 0 : i32
    %c0_i32_0 = arith.constant 0 : i32
    %c0_i32_1 = arith.constant 0 : i32
    return %c0_i32, %c0_i32_0 : i32, i32
  }
  func.func @transform_3(%arg0: i32) -> (i32, i32) {
    %c0_i32 = arith.constant 0 : i32
    %c0_i32_0 = arith.constant 0 : i32
    %c0_i32_1 = arith.constant 0 : i32
    return %c0_i32, %c0_i32_0 : i32, i32
  }
  func.func @transform_4(%arg0: i32) -> (i32, i32) {
    %c0_i32 = arith.constant 0 : i32
    %c0_i32_0 = arith.constant 0 : i32
    %c0_i32_1 = arith.constant 0 : i32
    return %c0_i32, %c0_i32_0 : i32, i32
  }
  func.func @transform_5(%arg0: i32) -> (i32, i32) {
    %c0_i32 = arith.constant 0 : i32
    %c0_i32_0 = arith.constant 0 : i32
    %c0_i32_1 = arith.constant 0 : i32
    return %c0_i32, %c0_i32_0 : i32, i32
  }
  func.func @transform_6(%arg0: i32) -> (i32, i32) {
    %c0_i32 = arith.constant 0 : i32
    %c0_i32_0 = arith.constant 0 : i32
    %c0_i32_1 = arith.constant 0 : i32
    return %c0_i32, %c0_i32_0 : i32, i32
  }
  func.func @transform_7(%arg0: i32) -> (i32, i32) {
    %c0_i32 = arith.constant 0 : i32
    %c0_i32_0 = arith.constant 0 : i32
    %c0_i32_1 = arith.constant 0 : i32
    return %c0_i32, %c0_i32_0 : i32, i32
  }
}

</mosaic_0001>

<llo_original>
// kernel: simple_model_forward.1
$region0: #{simple_model_forward.1}
  #allocation0 [shape = 'u32[]', space=smem, size = 0x4, offset = 0x4, fixed_abs, tag = 'smem constant byte address 0x4 - core index']
  #allocation1 [shape = 'u32[144,128]{1,0:T(1,128)}', space=vmem, size = 0x12000, scoped, tag = 'internal scratch']
  %s0 = inlined_call_operand.vmem [shape: bf16[8,32], index: 0, kind: input, shape index: {}]
  %s1 = inlined_call_operand.vmem [shape: bf16[32,512], index: 1, kind: input, shape index: {}]
  %s2 = inlined_call_operand.vmem [shape: f32[1,512], index: 2, kind: input, shape index: {}]
  %s3 = inlined_call_operand.vmem [shape: bf16[512,256], index: 3, kind: input, shape index: {}]
  %s4 = inlined_call_operand.vmem [shape: f32[1,256], index: 4, kind: input, shape index: {}]
  %s5 = inlined_call_operand.vmem [shape: bf16[256,128], index: 5, kind: input, shape index: {}]
  %s6 = inlined_call_operand.vmem [shape: f32[1,128], index: 6, kind: input, shape index: {}]
  %s7 = inlined_call_operand.hbm [shape: f32[8,128], index: 7, kind: output, shape index: {}]
  %s8 = sld [smem:[#allocation0]]
  $region38: #{simple_model_forward.1} parent=0
    _
  %s10 = ssub.s32 1, %s8
  %s11 = scalar_select 0, %s10, %s8
  $region1: #{simple_model_forward.1} parent=0
    #allocation2 [shape = 'u8[4096]{0}', space=vmem, size = 0x1000, scoped, tag = 'output window, operand 0, single buffered']
    #allocation3 [shape = 's32[1]{0}', space=sflag, size = 0x4, scoped, tag = 'scoped memory for simple_model_forward.1']
    %12 = vsyncpa [#allocation3], 0
    // Predicated region
    $region2: #{simple_model_forward.1} parent=1 // pred_check
      _
    $region3: #{simple_model_forward.1} parent=1 // pred_check_branch
      %14 = sbr.rel (0) target = $region5
    $region4: #{simple_model_forward.1} parent=1 // pred_region
      _
    $region5: #{simple_model_forward.1} parent=1 // pred_fallthru
      _
    // Predicated region
    $region6: #{simple_model_forward.1} parent=1 // pred_check
      _
    $region7: #{simple_model_forward.1} parent=1 // pred_check_branch
      %16 = sbr.rel (0) target = $region9
    $region8: #{simple_model_forward.1} parent=1 // pred_region
      _
    $region9: #{simple_model_forward.1} parent=1 // pred_fallthru
      _
    // Predicated region
    $region10: #{simple_model_forward.1} parent=1 // pred_check
      _
    $region11: #{simple_model_forward.1} parent=1 // pred_check_branch
      %18 = sbr.rel (0) target = $region13
    $region12: #{simple_model_forward.1} parent=1 // pred_region
      _
    $region13: #{simple_model_forward.1} parent=1 // pred_fallthru
      _
    // Predicated region
    $region14: #{simple_model_forward.1} parent=1 // pred_check
      _
    $region15: #{simple_model_forward.1} parent=1 // pred_check_branch
      %20 = sbr.rel (0) target = $region17
    $region16: #{simple_model_forward.1} parent=1 // pred_region
      _
    $region17: #{simple_model_forward.1} parent=1 // pred_fallthru
      _
    // Predicated region
    $region18: #{simple_model_forward.1} parent=1 // pred_check
      _
    $region19: #{simple_model_forward.1} parent=1 // pred_check_branch
      %22 = sbr.rel (0) target = $region21
    $region20: #{simple_model_forward.1} parent=1 // pred_region
      _
    $region21: #{simple_model_forward.1} parent=1 // pred_fallthru
      _
    // Predicated region
    $region22: #{simple_model_forward.1} parent=1 // pred_check
      _
    $region23: #{simple_model_forward.1} parent=1 // pred_check_branch
      %24 = sbr.rel (0) target = $region25
    $region24: #{simple_model_forward.1} parent=1 // pred_region
      _
    $region25: #{simple_model_forward.1} parent=1 // pred_fallthru
      _
    // Predicated region
    $region26: #{simple_model_forward.1} parent=1 // pred_check
      _
    $region27: #{simple_model_forward.1} parent=1 // pred_check_branch
      %26 = sbr.rel (0) target = $region29
    $region28: #{simple_model_forward.1} parent=1 // pred_region
      _
    $region29: #{simple_model_forward.1} parent=1 // pred_fallthru
      _
    %v28 = vld [vmem:[%s0] sm:$0xf]
    %v29 = vld [vmem:[%s1] sm:$0xff]
    %v30 = vld [vmem:[%s1 + $0x8] sm:$0xff]
    %v31 = vld [vmem:[%s1 + $0x10] sm:$0xff]
    %v32 = vld [vmem:[%s1 + $0x18] sm:$0xff]
    %v33 = vld [vmem:[%s1 + $0x20] sm:$0xff]
    %v34 = vld [vmem:[%s1 + $0x28] sm:$0xff]
    %v35 = vld [vmem:[%s1 + $0x30] sm:$0xff]
    %v36 = vld [vmem:[%s1 + $0x38] sm:$0xff]
    %v37 = vld [vmem:[%s2] sm:$0xf]
    %v39 = vlaneseq
    %v40 = vshrl.u32 %v39, 7
    %v41 = vsub.s32 0, %v40
    %v42 = vrot.slane %v37, %v41
    %v43 = vlaneseq
    %v44 = vshrl.u32 %v43, 7
    %v45 = vsub.s32 1, %v44
    %v46 = vrot.slane %v37, %v45
    %v47 = vlaneseq
    %v48 = vshrl.u32 %v47, 7
    %v49 = vsub.s32 2, %v48
    %v50 = vrot.slane %v37, %v49
    %v51 = vlaneseq
    %v52 = vshrl.u32 %v51, 7
    %v53 = vsub.s32 3, %v52
    %v54 = vrot.slane %v37, %v53
    %v67 = vunpack.c.l.b16 %v29
    %v68 = vunpack.c.h.b16 %v29
    %v69 = vunpack.c.l.b16 %v30
    %v70 = vunpack.c.h.b16 %v30
    %v71 = vunpack.c.l.b16 %v31
    %v72 = vunpack.c.h.b16 %v31
    %v73 = vunpack.c.l.b16 %v32
    %v74 = vunpack.c.h.b16 %v32
    %v75 = vunpack.c.l.b16 %v33
    %v76 = vunpack.c.h.b16 %v33
    %v77 = vunpack.c.l.b16 %v34
    %v78 = vunpack.c.h.b16 %v34
    %v79 = vunpack.c.l.b16 %v35
    %v80 = vunpack.c.h.b16 %v35
    %v81 = vunpack.c.l.b16 %v36
    %v82 = vunpack.c.h.b16 %v36
    %v83 = vpack.c.b16 %v71, %v67
    %v84 = vpack.c.b16 %v72, %v68
    %v85 = vpack.c.b16 %v73, %v69
    %v86 = vpack.c.b16 %v74, %v70
    %v87 = vpack.c.b16 %v79, %v75
    %v88 = vpack.c.b16 %v80, %v76
    %v89 = vpack.c.b16 %v81, %v77
    %v90 = vpack.c.b16 %v82, %v78
    %vm99 = vcmask 261120
    %v101 = vsel %vm99, %v28, 0
    %103 = vmatprep.subr.bf16.mxu0 %v84
    %104 = vmatpush1.bf16.msra.mxu0 %v83
    %105 = vmatprep.subr.bf16.mxu0 %v88
    %106 = vmatpush1.bf16.msra.mxu0 %v87
    %107 = vmatprep.subr.bf16.mxu0 0
    %108 = vmatpush1.bf16.msra.mxu0 0
    %109 = vmatprep.subr.bf16.mxu0 0
    %110 = vmatpush1.bf16.msra.mxu0 0
    %111 = vmatprep.subr.bf16.mxu0 0
    %112 = vmatpush1.bf16.msra.mxu0 0
    %113 = vmatprep.subr.bf16.mxu0 0
    %114 = vmatpush1.bf16.msra.mxu0 0
    %115 = vmatprep.subr.bf16.mxu0 0
    %116 = vmatpush1.bf16.msra.mxu0 0
    %117 = vmatprep.subr.bf16.mxu0 0
    %118 = vmatpush1.bf16.msra.mxu0 0
    %119 = vmatprep.subr.bf16.mxu0 0
    %120 = vmatpush1.bf16.msra.mxu0 0
    %121 = vmatprep.subr.bf16.mxu0 0
    %122 = vmatpush1.bf16.msra.mxu0 0
    %123 = vmatprep.subr.bf16.mxu0 0
    %124 = vmatpush1.bf16.msra.mxu0 0
    %125 = vmatprep.subr.bf16.mxu0 0
    %126 = vmatpush1.bf16.msra.mxu0 0
    %127 = vmatprep.subr.bf16.mxu0 0
    %128 = vmatpush1.bf16.msra.mxu0 0
    %129 = vmatprep.subr.bf16.mxu0 0
    %130 = vmatpush1.bf16.msra.mxu0 0
    %131 = vmatprep.subr.bf16.mxu0 0
    %132 = vmatpush1.bf16.msra.mxu0 0
    %133 = vmatprep.subr.bf16.mxu0 0
    %134 = vmatpush1.bf16.msra.mxu0 0
    %135 = vmatprep.mubr.bf16.mxu0 0
    %136 = vmatmul.mubr.bf16.gmra.mrb[0].mxu0 %v101
    %v137 = vpop.f32.mrb[0].mxu0
    %v138 = vadd.f32 %v42, %v137
    %v139 = vpop.f32.mrb[0].mxu0
    %v140 = vadd.f32 %v46, %v139
    %v141 = vpop.f32.mrb[0].mxu0
    %v142 = vpop.f32.mrb[0].mxu0
    %143 = vdwg.mxu0
    %144 = vmatprep.subr.bf16.mxu0 %v86
    %145 = vmatpush1.bf16.msra.mxu0 %v85
    %146 = vmatprep.subr.bf16.mxu0 %v90
    %147 = vmatpush1.bf16.msra.mxu0 %v89
    %148 = vmatprep.subr.bf16.mxu0 0
    %149 = vmatpush1.bf16.msra.mxu0 0
    %150 = vmatprep.subr.bf16.mxu0 0
    %151 = vmatpush1.bf16.msra.mxu0 0
    %152 = vmatprep.subr.bf16.mxu0 0
    %153 = vmatpush1.bf16.msra.mxu0 0
    %154 = vmatprep.subr.bf16.mxu0 0
    %155 = vmatpush1.bf16.msra.mxu0 0
    %156 = vmatprep.subr.bf16.mxu0 0
    %157 = vmatpush1.bf16.msra.mxu0 0
    %158 = vmatprep.subr.bf16.mxu0 0
    %159 = vmatpush1.bf16.msra.mxu0 0
    %160 = vmatprep.subr.bf16.mxu0 0
    %161 = vmatpush1.bf16.msra.mxu0 0
    %162 = vmatprep.subr.bf16.mxu0 0
    %163 = vmatpush1.bf16.msra.mxu0 0
    %164 = vmatprep.subr.bf16.mxu0 0
    %165 = vmatpush1.bf16.msra.mxu0 0
    %166 = vmatprep.subr.bf16.mxu0 0
    %167 = vmatpush1.bf16.msra.mxu0 0
    %168 = vmatprep.subr.bf16.mxu0 0
    %169 = vmatpush1.bf16.msra.mxu0 0
    %170 = vmatprep.subr.bf16.mxu0 0
    %171 = vmatpush1.bf16.msra.mxu0 0
    %172 = vmatprep.subr.bf16.mxu0 0
    %173 = vmatpush1.bf16.msra.mxu0 0
    %174 = vmatprep.subr.bf16.mxu0 0
    %175 = vmatpush1.bf16.msra.mxu0 0
    %176 = vmatprep.mubr.bf16.mxu0 0
    %177 = vmatmul.mubr.bf16.gmra.mrb[0].mxu0 %v101
    %v178 = vpop.f32.mrb[0].mxu0
    %v179 = vadd.f32 %v50, %v178
    %v180 = vpop.f32.mrb[0].mxu0
    %v181 = vadd.f32 %v54, %v180
    %v182 = vpop.f32.mrb[0].mxu0
    %v183 = vpop.f32.mrb[0].mxu0
    %184 = vdwg.mxu0
    %v185 = vmax.f32 %v138, 0.0
    %v186 = vmax.f32 %v140, 0.0
    %v187 = vmax.f32 %v179, 0.0
    %v188 = vmax.f32 %v181, 0.0
    %v189 = vpack.c.bf16 %v185, %v185
    %v190 = vpack.c.bf16 %v186, %v186
    %v191 = vpack.c.bf16 %v187, %v187
    %v192 = vpack.c.bf16 %v188, %v188
    %v193 = vld [vmem:[%s3] sm:$0xff]
    %v194 = vld [vmem:[%s3 + $0x8] sm:$0xff]
    %v195 = vld [vmem:[%s3 + $0x10] sm:$0xff]
    %v196 = vld [vmem:[%s3 + $0x18] sm:$0xff]
    %v197 = vld [vmem:[%s3 + $0x20] sm:$0xff]
    %v198 = vld [vmem:[%s3 + $0x28] sm:$0xff]
    %v199 = vld [vmem:[%s3 + $0x30] sm:$0xff]
    %v200 = vld [vmem:[%s3 + $0x38] sm:$0xff]
    %v201 = vld [vmem:[%s3 + $0x40] sm:$0xff]
    %v202 = vld [vmem:[%s3 + $0x48] sm:$0xff]
    %v203 = vld [vmem:[%s3 + $0x50] sm:$0xff]
    %v204 = vld [vmem:[%s3 + $0x58] sm:$0xff]
    %v205 = vld [vmem:[%s3 + $0x60] sm:$0xff]
    %v206 = vld [vmem:[%s3 + $0x68] sm:$0xff]
    %v207 = vld [vmem:[%s3 + $0x70] sm:$0xff]
    %v208 = vld [vmem:[%s3 + $0x78] sm:$0xff]
    %v209 = vld [vmem:[%s3 + $0x80] sm:$0xff]
    %v210 = vld [vmem:[%s3 + $0x88] sm:$0xff]
    %v211 = vld [vmem:[%s3 + $0x90] sm:$0xff]
    %v212 = vld [vmem:[%s3 + $0x98] sm:$0xff]
    %v213 = vld [vmem:[%s3 + $0xa0] sm:$0xff]
    %v214 = vld [vmem:[%s3 + $0xa8] sm:$0xff]
    %v215 = vld [vmem:[%s3 + $0xb0] sm:$0xff]
    %v216 = vld [vmem:[%s3 + $0xb8] sm:$0xff]
    %v217 = vld [vmem:[%s3 + $0xc0] sm:$0xff]
    %v218 = vld [vmem:[%s3 + $0xc8] sm:$0xff]
    %v219 = vld [vmem:[%s3 + $0xd0] sm:$0xff]
    %v220 = vld [vmem:[%s3 + $0xd8] sm:$0xff]
    %v221 = vld [vmem:[%s3 + $0xe0] sm:$0xff]
    %v222 = vld [vmem:[%s3 + $0xe8] sm:$0xff]
    %v223 = vld [vmem:[%s3 + $0xf0] sm:$0xff]
    %v224 = vld [vmem:[%s3 + $0xf8] sm:$0xff]
    %v225 = vld [vmem:[%s3 + $0x100] sm:$0xff]
    %v226 = vld [vmem:[%s3 + $0x108] sm:$0xff]
    %v227 = vld [vmem:[%s3 + $0x110] sm:$0xff]
    %v228 = vld [vmem:[%s3 + $0x118] sm:$0xff]
    %v229 = vld [vmem:[%s3 + $0x120] sm:$0xff]
    %v230 = vld [vmem:[%s3 + $0x128] sm:$0xff]
    %v231 = vld [vmem:[%s3 + $0x130] sm:$0xff]
    %v232 = vld [vmem:[%s3 + $0x138] sm:$0xff]
    %v233 = vld [vmem:[%s3 + $0x140] sm:$0xff]
    %v234 = vld [vmem:[%s3 + $0x148] sm:$0xff]
    %v235 = vld [vmem:[%s3 + $0x150] sm:$0xff]
    %v236 = vld [vmem:[%s3 + $0x158] sm:$0xff]
    %v237 = vld [vmem:[%s3 + $0x160] sm:$0xff]
    %v238 = vld [vmem:[%s3 + $0x168] sm:$0xff]
    %v239 = vld [vmem:[%s3 + $0x170] sm:$0xff]
    %v240 = vld [vmem:[%s3 + $0x178] sm:$0xff]
    %v241 = vld [vmem:[%s3 + $0x180] sm:$0xff]
    %v242 = vld [vmem:[%s3 + $0x188] sm:$0xff]
    %v243 = vld [vmem:[%s3 + $0x190] sm:$0xff]
    %v244 = vld [vmem:[%s3 + $0x198] sm:$0xff]
    %v245 = vld [vmem:[%s3 + $0x1a0] sm:$0xff]
    %v246 = vld [vmem:[%s3 + $0x1a8] sm:$0xff]
    %v247 = vld [vmem:[%s3 + $0x1b0] sm:$0xff]
    %v248 = vld [vmem:[%s3 + $0x1b8] sm:$0xff]
    %v249 = vld [vmem:[%s3 + $0x1c0] sm:$0xff]
    %v250 = vld [vmem:[%s3 + $0x1c8] sm:$0xff]
    %v251 = vld [vmem:[%s3 + $0x1d0] sm:$0xff]
    %v252 = vld [vmem:[%s3 + $0x1d8] sm:$0xff]
    %v253 = vld [vmem:[%s3 + $0x1e0] sm:$0xff]
    %v254 = vld [vmem:[%s3 + $0x1e8] sm:$0xff]
    %v255 = vld [vmem:[%s3 + $0x1f0] sm:$0xff]
    %v256 = vld [vmem:[%s3 + $0x1f8] sm:$0xff]
    %v257 = vld [vmem:[%s4] sm:$0x3]
    %v259 = vlaneseq
    %v260 = vshrl.u32 %v259, 7
    %v261 = vsub.s32 0, %v260
    %v262 = vrot.slane %v257, %v261
    %v263 = vlaneseq
    %v264 = vshrl.u32 %v263, 7
    %v265 = vsub.s32 1, %v264
    %v266 = vrot.slane %v257, %v265
    %v333 = vunpack.c.l.b16 %v193
    %v334 = vunpack.c.h.b16 %v193
    %v335 = vunpack.c.l.b16 %v194
    %v336 = vunpack.c.h.b16 %v194
    %v337 = vunpack.c.l.b16 %v195
    %v338 = vunpack.c.h.b16 %v195
    %v339 = vunpack.c.l.b16 %v196
    %v340 = vunpack.c.h.b16 %v196
    %v341 = vunpack.c.l.b16 %v197
    %v342 = vunpack.c.h.b16 %v197
    %v343 = vunpack.c.l.b16 %v198
    %v344 = vunpack.c.h.b16 %v198
    %v345 = vunpack.c.l.b16 %v199
    %v346 = vunpack.c.h.b16 %v199
    %v347 = vunpack.c.l.b16 %v200
    %v348 = vunpack.c.h.b16 %v200
    %v349 = vunpack.c.l.b16 %v201
    %v350 = vunpack.c.h.b16 %v201
    %v351 = vunpack.c.l.b16 %v202
    %v352 = vunpack.c.h.b16 %v202
    %v353 = vunpack.c.l.b16 %v203
    %v354 = vunpack.c.h.b16 %v203
    %v355 = vunpack.c.l.b16 %v204
    %v356 = vunpack.c.h.b16 %v204
    %v357 = vunpack.c.l.b16 %v205
    %v358 = vunpack.c.h.b16 %v205
    %v359 = vunpack.c.l.b16 %v206
    %v360 = vunpack.c.h.b16 %v206
    %v361 = vunpack.c.l.b16 %v207
    %v362 = vunpack.c.h.b16 %v207
    %v363 = vunpack.c.l.b16 %v208
    %v364 = vunpack.c.h.b16 %v208
    %v365 = vunpack.c.l.b16 %v209
    %v366 = vunpack.c.h.b16 %v209
    %v367 = vunpack.c.l.b16 %v210
    %v368 = vunpack.c.h.b16 %v210
    %v369 = vunpack.c.l.b16 %v211
    %v370 = vunpack.c.h.b16 %v211
    %v371 = vunpack.c.l.b16 %v212
    %v372 = vunpack.c.h.b16 %v212
    %v373 = vunpack.c.l.b16 %v213
    %v374 = vunpack.c.h.b16 %v213
    %v375 = vunpack.c.l.b16 %v214
    %v376 = vunpack.c.h.b16 %v214
    %v377 = vunpack.c.l.b16 %v215
    %v378 = vunpack.c.h.b16 %v215
    %v379 = vunpack.c.l.b16 %v216
    %v380 = vunpack.c.h.b16 %v216
    %v381 = vunpack.c.l.b16 %v217
    %v382 = vunpack.c.h.b16 %v217
    %v383 = vunpack.c.l.b16 %v218
    %v384 = vunpack.c.h.b16 %v218
    %v385 = vunpack.c.l.b16 %v219
    %v386 = vunpack.c.h.b16 %v219
    %v387 = vunpack.c.l.b16 %v220
    %v388 = vunpack.c.h.b16 %v220
    %v389 = vunpack.c.l.b16 %v221
    %v390 = vunpack.c.h.b16 %v221
    %v391 = vunpack.c.l.b16 %v222
    %v392 = vunpack.c.h.b16 %v222
    %v393 = vunpack.c.l.b16 %v223
    %v394 = vunpack.c.h.b16 %v223
    %v395 = vunpack.c.l.b16 %v224
    %v396 = vunpack.c.h.b16 %v224
    %v397 = vunpack.c.l.b16 %v225
    %v398 = vunpack.c.h.b16 %v225
    %v399 = vunpack.c.l.b16 %v226
    %v400 = vunpack.c.h.b16 %v226
    %v401 = vunpack.c.l.b16 %v227
    %v402 = vunpack.c.h.b16 %v227
    %v403 = vunpack.c.l.b16 %v228
    %v404 = vunpack.c.h.b16 %v228
    %v405 = vunpack.c.l.b16 %v229
    %v406 = vunpack.c.h.b16 %v229
    %v407 = vunpack.c.l.b16 %v230
    %v408 = vunpack.c.h.b16 %v230
    %v409 = vunpack.c.l.b16 %v231
    %v410 = vunpack.c.h.b16 %v231
    %v411 = vunpack.c.l.b16 %v232
    %v412 = vunpack.c.h.b16 %v232
    %v413 = vunpack.c.l.b16 %v233
    %v414 = vunpack.c.h.b16 %v233
    %v415 = vunpack.c.l.b16 %v234
    %v416 = vunpack.c.h.b16 %v234
    %v417 = vunpack.c.l.b16 %v235
    %v418 = vunpack.c.h.b16 %v235
    %v419 = vunpack.c.l.b16 %v236
    %v420 = vunpack.c.h.b16 %v236
    %v421 = vunpack.c.l.b16 %v237
    %v422 = vunpack.c.h.b16 %v237
    %v423 = vunpack.c.l.b16 %v238
    %v424 = vunpack.c.h.b16 %v238
    %v425 = vunpack.c.l.b16 %v239
    %v426 = vunpack.c.h.b16 %v239
    %v427 = vunpack.c.l.b16 %v240
    %v428 = vunpack.c.h.b16 %v240
    %v429 = vunpack.c.l.b16 %v241
    %v430 = vunpack.c.h.b16 %v241
    %v431 = vunpack.c.l.b16 %v242
    %v432 = vunpack.c.h.b16 %v242
    %v433 = vunpack.c.l.b16 %v243
    %v434 = vunpack.c.h.b16 %v243
    %v435 = vunpack.c.l.b16 %v244
    %v436 = vunpack.c.h.b16 %v244
    %v437 = vunpack.c.l.b16 %v245
    %v438 = vunpack.c.h.b16 %v245
    %v439 = vunpack.c.l.b16 %v246
    %v440 = vunpack.c.h.b16 %v246
    %v441 = vunpack.c.l.b16 %v247
    %v442 = vunpack.c.h.b16 %v247
    %v443 = vunpack.c.l.b16 %v248
    %v444 = vunpack.c.h.b16 %v248
    %v445 = vunpack.c.l.b16 %v249
    %v446 = vunpack.c.h.b16 %v249
    %v447 = vunpack.c.l.b16 %v250
    %v448 = vunpack.c.h.b16 %v250
    %v449 = vunpack.c.l.b16 %v251
    %v450 = vunpack.c.h.b16 %v251
    %v451 = vunpack.c.l.b16 %v252
    %v452 = vunpack.c.h.b16 %v252
    %v453 = vunpack.c.l.b16 %v253
    %v454 = vunpack.c.h.b16 %v253
    %v455 = vunpack.c.l.b16 %v254
    %v456 = vunpack.c.h.b16 %v254
    %v457 = vunpack.c.l.b16 %v255
    %v458 = vunpack.c.h.b16 %v255
    %v459 = vunpack.c.l.b16 %v256
    %v460 = vunpack.c.h.b16 %v256
    %v461 = vpack.c.b16 %v335, %v333
    %v462 = vpack.c.b16 %v336, %v334
    %v463 = vpack.c.b16 %v339, %v337
    %v464 = vpack.c.b16 %v340, %v338
    %v465 = vpack.c.b16 %v343, %v341
    %v466 = vpack.c.b16 %v344, %v342
    %v467 = vpack.c.b16 %v347, %v345
    %v468 = vpack.c.b16 %v348, %v346
    %v469 = vpack.c.b16 %v351, %v349
    %v470 = vpack.c.b16 %v352, %v350
    %v471 = vpack.c.b16 %v355, %v353
    %v472 = vpack.c.b16 %v356, %v354
    %v473 = vpack.c.b16 %v359, %v357
    %v474 = vpack.c.b16 %v360, %v358
    %v475 = vpack.c.b16 %v363, %v361
    %v476 = vpack.c.b16 %v364, %v362
    %v477 = vpack.c.b16 %v367, %v365
    %v478 = vpack.c.b16 %v368, %v366
    %v479 = vpack.c.b16 %v371, %v369
    %v480 = vpack.c.b16 %v372, %v370
    %v481 = vpack.c.b16 %v375, %v373
    %v482 = vpack.c.b16 %v376, %v374
    %v483 = vpack.c.b16 %v379, %v377
    %v484 = vpack.c.b16 %v380, %v378
    %v485 = vpack.c.b16 %v383, %v381
    %v486 = vpack.c.b16 %v384, %v382
    %v487 = vpack.c.b16 %v387, %v385
    %v488 = vpack.c.b16 %v388, %v386
    %v489 = vpack.c.b16 %v391, %v389
    %v490 = vpack.c.b16 %v392, %v390
    %v491 = vpack.c.b16 %v395, %v393
    %v492 = vpack.c.b16 %v396, %v394
    %v493 = vpack.c.b16 %v399, %v397
    %v494 = vpack.c.b16 %v400, %v398
    %v495 = vpack.c.b16 %v403, %v401
    %v496 = vpack.c.b16 %v404, %v402
    %v497 = vpack.c.b16 %v407, %v405
    %v498 = vpack.c.b16 %v408, %v406
    %v499 = vpack.c.b16 %v411, %v409
    %v500 = vpack.c.b16 %v412, %v410
    %v501 = vpack.c.b16 %v415, %v413
    %v502 = vpack.c.b16 %v416, %v414
    %v503 = vpack.c.b16 %v419, %v417
    %v504 = vpack.c.b16 %v420, %v418
    %v505 = vpack.c.b16 %v423, %v421
    %v506 = vpack.c.b16 %v424, %v422
    %v507 = vpack.c.b16 %v427, %v425
    %v508 = vpack.c.b16 %v428, %v426
    %v509 = vpack.c.b16 %v431, %v429
    %v510 = vpack.c.b16 %v432, %v430
    %v511 = vpack.c.b16 %v435, %v433
    %v512 = vpack.c.b16 %v436, %v434
    %v513 = vpack.c.b16 %v439, %v437
    %v514 = vpack.c.b16 %v440, %v438
    %v515 = vpack.c.b16 %v443, %v441
    %v516 = vpack.c.b16 %v444, %v442
    %v517 = vpack.c.b16 %v447, %v445
    %v518 = vpack.c.b16 %v448, %v446
    %v519 = vpack.c.b16 %v451, %v449
    %v520 = vpack.c.b16 %v452, %v450
    %v521 = vpack.c.b16 %v455, %v453
    %v522 = vpack.c.b16 %v456, %v454
    %v523 = vpack.c.b16 %v459, %v457
    %v524 = vpack.c.b16 %v460, %v458
    %589 = vmatprep.subr.bf16.mxu0 %v462
    %590 = vmatpush1.bf16.msra.mxu0 %v461
    %591 = vmatprep.subr.bf16.mxu0 %v464
    %592 = vmatpush1.bf16.msra.mxu0 %v463
    %593 = vmatprep.subr.bf16.mxu0 %v466
    %594 = vmatpush1.bf16.msra.mxu0 %v465
    %595 = vmatprep.subr.bf16.mxu0 %v468
    %596 = vmatpush1.bf16.msra.mxu0 %v467
    %597 = vmatprep.subr.bf16.mxu0 %v470
    %598 = vmatpush1.bf16.msra.mxu0 %v469
    %599 = vmatprep.subr.bf16.mxu0 %v472
    %600 = vmatpush1.bf16.msra.mxu0 %v471
    %601 = vmatprep.subr.bf16.mxu0 %v474
    %602 = vmatpush1.bf16.msra.mxu0 %v473
    %603 = vmatprep.subr.bf16.mxu0 %v476
    %604 = vmatpush1.bf16.msra.mxu0 %v475
    %605 = vmatprep.subr.bf16.mxu0 %v478
    %606 = vmatpush1.bf16.msra.mxu0 %v477
    %607 = vmatprep.subr.bf16.mxu0 %v480
    %608 = vmatpush1.bf16.msra.mxu0 %v479
    %609 = vmatprep.subr.bf16.mxu0 %v482
    %610 = vmatpush1.bf16.msra.mxu0 %v481
    %611 = vmatprep.subr.bf16.mxu0 %v484
    %612 = vmatpush1.bf16.msra.mxu0 %v483
    %613 = vmatprep.subr.bf16.mxu0 %v486
    %614 = vmatpush1.bf16.msra.mxu0 %v485
    %615 = vmatprep.subr.bf16.mxu0 %v488
    %616 = vmatpush1.bf16.msra.mxu0 %v487
    %617 = vmatprep.subr.bf16.mxu0 %v490
    %618 = vmatpush1.bf16.msra.mxu0 %v489
    %619 = vmatprep.subr.bf16.mxu0 %v492
    %620 = vmatpush1.bf16.msra.mxu0 %v491
    %621 = vmatprep.mubr.bf16.mxu0 %v190
    %622 = vmatmul.mubr.bf16.gmra.mrb[0].mxu0 %v189
    %v623 = vpop.f32.mrb[0].mxu0
    %v624 = vadd.f32 %v262, %v623
    %v625 = vpop.f32.mrb[0].mxu0
    %v626 = vadd.f32 %v266, %v625
    %v627 = vpop.f32.mrb[0].mxu0
    %v628 = vpop.f32.mrb[0].mxu0
    %629 = vdwg.mxu0
    %630 = vmatprep.subr.bf16.mxu0 %v494
    %631 = vmatpush1.bf16.msra.mxu0 %v493
    %632 = vmatprep.subr.bf16.mxu0 %v496
    %633 = vmatpush1.bf16.msra.mxu0 %v495
    %634 = vmatprep.subr.bf16.mxu0 %v498
    %635 = vmatpush1.bf16.msra.mxu0 %v497
    %636 = vmatprep.subr.bf16.mxu0 %v500
    %637 = vmatpush1.bf16.msra.mxu0 %v499
    %638 = vmatprep.subr.bf16.mxu0 %v502
    %639 = vmatpush1.bf16.msra.mxu0 %v501
    %640 = vmatprep.subr.bf16.mxu0 %v504
    %641 = vmatpush1.bf16.msra.mxu0 %v503
    %642 = vmatprep.subr.bf16.mxu0 %v506
    %643 = vmatpush1.bf16.msra.mxu0 %v505
    %644 = vmatprep.subr.bf16.mxu0 %v508
    %645 = vmatpush1.bf16.msra.mxu0 %v507
    %646 = vmatprep.subr.bf16.mxu0 %v510
    %647 = vmatpush1.bf16.msra.mxu0 %v509
    %648 = vmatprep.subr.bf16.mxu0 %v512
    %649 = vmatpush1.bf16.msra.mxu0 %v511
    %650 = vmatprep.subr.bf16.mxu0 %v514
    %651 = vmatpush1.bf16.msra.mxu0 %v513
    %652 = vmatprep.subr.bf16.mxu0 %v516
    %653 = vmatpush1.bf16.msra.mxu0 %v515
    %654 = vmatprep.subr.bf16.mxu0 %v518
    %655 = vmatpush1.bf16.msra.mxu0 %v517
    %656 = vmatprep.subr.bf16.mxu0 %v520
    %657 = vmatpush1.bf16.msra.mxu0 %v519
    %658 = vmatprep.subr.bf16.mxu0 %v522
    %659 = vmatpush1.bf16.msra.mxu0 %v521
    %660 = vmatprep.subr.bf16.mxu0 %v524
    %661 = vmatpush1.bf16.msra.mxu0 %v523
    %662 = vmatprep.mubr.bf16.mxu0 %v192
    %663 = vmatmul.mubr.bf16.gmra.mrb[0].mxu0 %v191
    %v664 = vpop.f32.mrb[0].mxu0
    %v665 = vadd.f32 %v624, %v664
    %v666 = vpop.f32.mrb[0].mxu0
    %v667 = vadd.f32 %v626, %v666
    %v668 = vpop.f32.mrb[0].mxu0
    %v669 = vpop.f32.mrb[0].mxu0
    %670 = vdwg.mxu0
    %v671 = vmax.f32 %v665, 0.0
    %v672 = vmax.f32 %v667, 0.0
    %v673 = vpack.c.bf16 %v671, %v671
    %v674 = vpack.c.bf16 %v672, %v672
    %v675 = vld [vmem:[%s5] sm:$0xf]
    %v676 = vld [vmem:[%s5 + $0x4] sm:$0xf]
    %v677 = vld [vmem:[%s5 + $0x8] sm:$0xf]
    %v678 = vld [vmem:[%s5 + $0xc] sm:$0xf]
    %v679 = vld [vmem:[%s5 + $0x10] sm:$0xf]
    %v680 = vld [vmem:[%s5 + $0x14] sm:$0xf]
    %v681 = vld [vmem:[%s5 + $0x18] sm:$0xf]
    %v682 = vld [vmem:[%s5 + $0x1c] sm:$0xf]
    %v683 = vld [vmem:[%s5 + $0x20] sm:$0xf]
    %v684 = vld [vmem:[%s5 + $0x24] sm:$0xf]
    %v685 = vld [vmem:[%s5 + $0x28] sm:$0xf]
    %v686 = vld [vmem:[%s5 + $0x2c] sm:$0xf]
    %v687 = vld [vmem:[%s5 + $0x30] sm:$0xf]
    %v688 = vld [vmem:[%s5 + $0x34] sm:$0xf]
    %v689 = vld [vmem:[%s5 + $0x38] sm:$0xf]
    %v690 = vld [vmem:[%s5 + $0x3c] sm:$0xf]
    %v691 = vld [vmem:[%s5 + $0x40] sm:$0xf]
    %v692 = vld [vmem:[%s5 + $0x44] sm:$0xf]
    %v693 = vld [vmem:[%s5 + $0x48] sm:$0xf]
    %v694 = vld [vmem:[%s5 + $0x4c] sm:$0xf]
    %v695 = vld [vmem:[%s5 + $0x50] sm:$0xf]
    %v696 = vld [vmem:[%s5 + $0x54] sm:$0xf]
    %v697 = vld [vmem:[%s5 + $0x58] sm:$0xf]
    %v698 = vld [vmem:[%s5 + $0x5c] sm:$0xf]
    %v699 = vld [vmem:[%s5 + $0x60] sm:$0xf]
    %v700 = vld [vmem:[%s5 + $0x64] sm:$0xf]
    %v701 = vld [vmem:[%s5 + $0x68] sm:$0xf]
    %v702 = vld [vmem:[%s5 + $0x6c] sm:$0xf]
    %v703 = vld [vmem:[%s5 + $0x70] sm:$0xf]
    %v704 = vld [vmem:[%s5 + $0x74] sm:$0xf]
    %v705 = vld [vmem:[%s5 + $0x78] sm:$0xf]
    %v706 = vld [vmem:[%s5 + $0x7c] sm:$0xf]
    %v707 = vld [vmem:[%s6] sm:$0x1]
    %v709 = vlaneseq
    %v710 = vshrl.u32 %v709, 7
    %v711 = vsub.s32 0, %v710
    %v712 = vrot.slane %v707, %v711
    %v746 = vunpack.c.l.b16 %v675
    %v747 = vunpack.c.l.b16 %v676
    %v748 = vunpack.c.l.b16 %v677
    %v749 = vunpack.c.l.b16 %v678
    %v750 = vunpack.c.l.b16 %v679
    %v751 = vunpack.c.l.b16 %v680
    %v752 = vunpack.c.l.b16 %v681
    %v753 = vunpack.c.l.b16 %v682
    %v754 = vunpack.c.l.b16 %v683
    %v755 = vunpack.c.l.b16 %v684
    %v756 = vunpack.c.l.b16 %v685
    %v757 = vunpack.c.l.b16 %v686
    %v758 = vunpack.c.l.b16 %v687
    %v759 = vunpack.c.l.b16 %v688
    %v760 = vunpack.c.l.b16 %v689
    %v761 = vunpack.c.l.b16 %v690
    %v762 = vunpack.c.l.b16 %v691
    %v763 = vunpack.c.l.b16 %v692
    %v764 = vunpack.c.l.b16 %v693
    %v765 = vunpack.c.l.b16 %v694
    %v766 = vunpack.c.l.b16 %v695
    %v767 = vunpack.c.l.b16 %v696
    %v768 = vunpack.c.l.b16 %v697
    %v769 = vunpack.c.l.b16 %v698
    %v770 = vunpack.c.l.b16 %v699
    %v771 = vunpack.c.l.b16 %v700
    %v772 = vunpack.c.l.b16 %v701
    %v773 = vunpack.c.l.b16 %v702
    %v774 = vunpack.c.l.b16 %v703
    %v775 = vunpack.c.l.b16 %v704
    %v776 = vunpack.c.l.b16 %v705
    %v777 = vunpack.c.l.b16 %v706
    %v778 = vpack.c.b16 %v747, %v746
    %v779 = vpack.c.b16 %v749, %v748
    %v780 = vpack.c.b16 %v751, %v750
    %v781 = vpack.c.b16 %v753, %v752
    %v782 = vpack.c.b16 %v755, %v754
    %v783 = vpack.c.b16 %v757, %v756
    %v784 = vpack.c.b16 %v759, %v758
    %v785 = vpack.c.b16 %v761, %v760
    %v786 = vpack.c.b16 %v763, %v762
    %v787 = vpack.c.b16 %v765, %v764
    %v788 = vpack.c.b16 %v767, %v766
    %v789 = vpack.c.b16 %v769, %v768
    %v790 = vpack.c.b16 %v771, %v770
    %v791 = vpack.c.b16 %v773, %v772
    %v792 = vpack.c.b16 %v775, %v774
    %v793 = vpack.c.b16 %v777, %v776
    %810 = vmatprep.subr.bf16.mxu0 0
    %811 = vmatpush1.bf16.msra.mxu0 %v778
    %812 = vmatprep.subr.bf16.mxu0 0
    %813 = vmatpush1.bf16.msra.mxu0 %v779
    %814 = vmatprep.subr.bf16.mxu0 0
    %815 = vmatpush1.bf16.msra.mxu0 %v780
    %816 = vmatprep.subr.bf16.mxu0 0
    %817 = vmatpush1.bf16.msra.mxu0 %v781
    %818 = vmatprep.subr.bf16.mxu0 0
    %819 = vmatpush1.bf16.msra.mxu0 %v782
    %820 = vmatprep.subr.bf16.mxu0 0
    %821 = vmatpush1.bf16.msra.mxu0 %v783
    %822 = vmatprep.subr.bf16.mxu0 0
    %823 = vmatpush1.bf16.msra.mxu0 %v784
    %824 = vmatprep.subr.bf16.mxu0 0
    %825 = vmatpush1.bf16.msra.mxu0 %v785
    %826 = vmatprep.subr.bf16.mxu0 0
    %827 = vmatpush1.bf16.msra.mxu0 %v786
    %828 = vmatprep.subr.bf16.mxu0 0
    %829 = vmatpush1.bf16.msra.mxu0 %v787
    %830 = vmatprep.subr.bf16.mxu0 0
    %831 = vmatpush1.bf16.msra.mxu0 %v788
    %832 = vmatprep.subr.bf16.mxu0 0
    %833 = vmatpush1.bf16.msra.mxu0 %v789
    %834 = vmatprep.subr.bf16.mxu0 0
    %835 = vmatpush1.bf16.msra.mxu0 %v790
    %836 = vmatprep.subr.bf16.mxu0 0
    %837 = vmatpush1.bf16.msra.mxu0 %v791
    %838 = vmatprep.subr.bf16.mxu0 0
    %839 = vmatpush1.bf16.msra.mxu0 %v792
    %840 = vmatprep.subr.bf16.mxu0 0
    %841 = vmatpush1.bf16.msra.mxu0 %v793
    %842 = vmatprep.mubr.bf16.mxu0 %v674
    %843 = vmatmul.mubr.bf16.gmra.mrb[0].mxu0 %v673
    %v844 = vpop.f32.mrb[0].mxu0
    %v845 = vadd.f32 %v712, %v844
    %v846 = vpop.f32.mrb[0].mxu0
    %v847 = vpop.f32.mrb[0].mxu0
    %v848 = vpop.f32.mrb[0].mxu0
    %849 = vdwg.mxu0
    %850 = vst [vmem:[#allocation2] sm:$0xff] %v845
    // Predicated region
    $region30: #{simple_model_forward.1} parent=1 // pred_check
      _
    $region31: #{simple_model_forward.1} parent=1 // pred_check_branch
      %852 = sbr.rel (0) target = $region33
    $region32: #{simple_model_forward.1} parent=1 // pred_region
      %s854 = ssub.s32 128, 128
      %855 = vsyncadd [#allocation3], %s854
      %s857 = sshll.u32 [#allocation2], 4
      %s858 = int_to_ptr.vmem [resolvable:$true] %s857
      %860 = dma.vmem_to_hbm [thread:$0]  %s858, 128, %s7, [#allocation3]
    $region33: #{simple_model_forward.1} parent=1 // pred_fallthru
      _
    // Predicated region
    $region34: #{simple_model_forward.1} parent=1 // pred_check
      _
    $region35: #{simple_model_forward.1} parent=1 // pred_check_branch
      %862 = sbr.rel (0) target = $region37
    $region36: #{simple_model_forward.1} parent=1 // pred_region
      %863 = dma.done [#allocation3], 128
    $region37: #{simple_model_forward.1} parent=1 // pred_fallthru
      _
    %864 = vsyncpa [#allocation3], 1

</llo_original>
